<compile_context>
chip_gen: v7x
topology: tpu7x:2x2x1
jax: 0.10.0
libtpu: 0.0.40
codegen_flags: <defaults>
</compile_context>

<pallas_src>
import functools
import math

import jax
import jax.numpy as jnp
from jax import lax
from jax.experimental import pallas as pl
from jax.experimental.pallas import tpu as pltpu


# ---------------------------------------------------------------------------
# Kernel 1: fused QKV projection. Emits Q/K/V in head-major (B, H, S, hd)
# bf16 layout so the attention kernel slices per-head blocks with plain
# BlockSpecs (static layouts, no dynamic lane offsets).
# ---------------------------------------------------------------------------
def qkv_proj_kernel(x_ref, wqkv_ref, bqkv_ref, q_ref, k_ref, v_ref,
                    *, n_heads, head_dim, d_model):
    outs = (q_ref, k_ref, v_ref)
    for j in range(3):                                   # static: Q, K, V
        w = wqkv_ref[:, j * d_model:(j + 1) * d_model]   # (D, D) bf16, static slice
        y = jnp.dot(x_ref[0], w,                         # (TS, D), f32 accumulation
                    preferred_element_type=jnp.float32)
        y = (y + bqkv_ref[:, j * d_model:(j + 1) * d_model]).astype(jnp.bfloat16)
        for h in range(n_heads):                         # static slab scatter
            outs[j][0, h] = y[:, h * head_dim:(h + 1) * head_dim]


# ---------------------------------------------------------------------------
# Kernel 2: scaled-dot-product attention for one (batch, head, q-tile).
# Scale is pre-folded into Q (via Wq/bq in the wrapper).
# ---------------------------------------------------------------------------
def attn_kernel(q_ref, k_ref, v_ref, ho_ref, attnw_ref):
    q = q_ref[0, 0]                                      # (TQ, hd) bf16
    k = k_ref[0, 0]                                      # (S,  hd) bf16
    v = v_ref[0, 0]                                      # (S,  hd) bf16

    # scores = q @ k^T  (contract over head_dim), f32 accumulation
    s = lax.dot_general(q, k, (((1,), (1,)), ((), ())),
                        preferred_element_type=jnp.float32)   # (TQ, S)
    s = s - jnp.max(s, axis=-1, keepdims=True)
    e = jnp.exp(s)
    w = e / jnp.sum(e, axis=-1, keepdims=True)           # exact softmax (exported)

    attnw_ref[0, 0] = w.astype(attnw_ref.dtype)
    ho = jnp.dot(w.astype(jnp.bfloat16), v,              # (TQ, hd), f32 acc
                 preferred_element_type=jnp.float32)
    ho_ref[0, 0] = ho.astype(jnp.bfloat16)


# ---------------------------------------------------------------------------
# Kernel 3: output projection. Assemble per-head slabs into a (TS, D) bf16
# VMEM scratch at static lane offsets, then a single full-D Wo matmul + bias.
# ---------------------------------------------------------------------------
def out_proj_kernel(ao_ref, wo_ref, bo_ref, out_ref, asm_sc,
                    *, n_heads, head_dim):
    for h in range(n_heads):                             # static lane offsets
        asm_sc[:, h * head_dim:(h + 1) * head_dim] = ao_ref[0, h]
    out_ref[0] = (jnp.dot(asm_sc[...], wo_ref[...],
                          preferred_element_type=jnp.float32) + bo_ref[...])


def _pick_tile(S, t):
    if t is not None:
        assert S % t == 0
        return t
    for cand in (256, 128):                              # 256 favors v6e/v7x MXU rows
        if S % cand == 0:
            return cand
    return S


def multi_head_self_attention(x, params, n_heads, q_tile=None, s_tile=None,
                              attn_weights_dtype=jnp.float32):
    B, S, D = x.shape
    assert D % n_heads == 0
    hd = D // n_heads
    q_tile = _pick_tile(S, q_tile)
    s_tile = _pick_tile(S, s_tile)

    scale = 1.0 / math.sqrt(hd)
    # Fold 1/sqrt(head_dim) into Wq AND bq in f32, then cast weights to bf16.
    wqkv = jnp.concatenate([params["wq"] * scale, params["wk"], params["wv"]],
                           axis=1).astype(jnp.bfloat16)   # (D, 3D) bf16
    bqkv = jnp.concatenate([params["bq"] * scale, params["bk"], params["bv"]],
                           axis=1)                        # (1, 3D) f32
    wo = params["wo"].astype(jnp.bfloat16)                # (D, D) bf16
    bo = params["bo"]                                     # (1, D) f32
    x_bf = x.astype(jnp.bfloat16)                         # halve x HBM read

    # ---- 1) fused QKV projection --------------------------------------------
    qkv_kernel = functools.partial(qkv_proj_kernel, n_heads=n_heads,
                                   head_dim=hd, d_model=D)
    q, k, v = pl.pallas_call(
        qkv_kernel,
        out_shape=tuple(jax.ShapeDtypeStruct((B, n_heads, S, hd), jnp.bfloat16)
                        for _ in range(3)),
        grid=(B, S // s_tile),
        in_specs=[
            pl.BlockSpec((1, s_tile, D), lambda b, si: (b, si, 0)),
            pl.BlockSpec((D, 3 * D), lambda b, si: (0, 0)),   # constant index map
            pl.BlockSpec((1, 3 * D), lambda b, si: (0, 0)),
        ],
        out_specs=tuple(
            pl.BlockSpec((1, n_heads, s_tile, hd), lambda b, si: (b, 0, si, 0))
            for _ in range(3)),
        compiler_params=pltpu.CompilerParams(
            dimension_semantics=("parallel", "parallel")),
    )(x_bf, wqkv, bqkv)

    # ---- 2) attention: grid (B, H, q-tiles); attnw block is per-head --------
    ho, attn_w = pl.pallas_call(
        attn_kernel,
        out_shape=(
            jax.ShapeDtypeStruct((B, n_heads, S, hd), jnp.bfloat16),
            jax.ShapeDtypeStruct((B, n_heads, S, S), attn_weights_dtype),
        ),
        grid=(B, n_heads, S // q_tile),
        in_specs=[
            pl.BlockSpec((1, 1, q_tile, hd), lambda b, h, qi: (b, h, qi, 0)),
            pl.BlockSpec((1, 1, S, hd), lambda b, h, qi: (b, h, 0, 0)),
            pl.BlockSpec((1, 1, S, hd), lambda b, h, qi: (b, h, 0, 0)),
        ],
        out_specs=(
            pl.BlockSpec((1, 1, q_tile, hd), lambda b, h, qi: (b, h, qi, 0)),
            pl.BlockSpec((1, 1, q_tile, S), lambda b, h, qi: (b, h, qi, 0)),
        ),
        compiler_params=pltpu.CompilerParams(
            dimension_semantics=("parallel", "parallel", "arbitrary")),
    )(q, k, v)

    # ---- 3) output projection ------------------------------------------------
    proj_kernel = functools.partial(out_proj_kernel, n_heads=n_heads, head_dim=hd)
    out = pl.pallas_call(
        proj_kernel,
        out_shape=jax.ShapeDtypeStruct((B, S, D), jnp.float32),
        grid=(B, S // s_tile),
        in_specs=[
            pl.BlockSpec((1, n_heads, s_tile, hd), lambda b, si: (b, 0, si, 0)),
            pl.BlockSpec((D, D), lambda b, si: (0, 0)),
            pl.BlockSpec((1, D), lambda b, si: (0, 0)),
        ],
        out_specs=pl.BlockSpec((1, s_tile, D), lambda b, si: (b, si, 0)),
        scratch_shapes=[pltpu.VMEM((s_tile, D), jnp.bfloat16)],
        compiler_params=pltpu.CompilerParams(
            dimension_semantics=("parallel", "parallel")),
    )(ho, wo, bo)

    return out, attn_w


def init_params(key, d_model):
    """nn.Linear-style init U(-1/sqrt(fan_in), 1/sqrt(fan_in)).
    Weights stored as [D_in, D_out] (transposed vs torch's [out, in])."""
    bound = 1.0 / math.sqrt(d_model)
    keys = jax.random.split(key, 8)
    names = ["wq", "bq", "wk", "bk", "wv", "bv", "wo", "bo"]
    params = {}
    for i, name in enumerate(names):
        shape = (d_model, d_model) if name.startswith("w") else (1, d_model)
        params[name] = jax.random.uniform(
            keys[i], shape, dtype=jnp.float32, minval=-bound, maxval=bound)
    return params


def ref_forward(x, params, n_heads):
    """Pure-JAX f32 reference (mirrors the PyTorch forward, mask=None, eval)."""
    B, S, D = x.shape
    hd = D // n_heads
    q = x @ params["wq"] + params["bq"]
    k = x @ params["wk"] + params["bk"]
    v = x @ params["wv"] + params["bv"]
    q = q.reshape(B, S, n_heads, hd).transpose(0, 2, 1, 3)
    k = k.reshape(B, S, n_heads, hd).transpose(0, 2, 1, 3)
    v = v.reshape(B, S, n_heads, hd).transpose(0, 2, 1, 3)
    scores = jnp.einsum("bhqd,bhkd->bhqk", q, k) / math.sqrt(hd)
    w = jax.nn.softmax(scores, axis=-1)
    o = jnp.einsum("bhqk,bhkd->bhqd", w, v).transpose(0, 2, 1, 3).reshape(B, S, D)
    out = o @ params["wo"] + params["bo"]
    return out, w


if __name__ == "__main__":
    B, S, D, H = 2, 8, 32, 4  # batch, seq, d_model, n_heads (head_dim = 8)

    key = jax.random.PRNGKey(0)
    k_x, k_p = jax.random.split(key)
    x = jax.random.normal(k_x, (B, S, D), dtype=jnp.float32)
    params = init_params(k_p, D)

    out, attn_w = multi_head_self_attention(x, params, H)
    out = jax.block_until_ready(out)
    attn_w = jax.block_until_ready(attn_w)

    ref_out, ref_w = ref_forward(x, params, H)
    assert out.shape == (B, S, D) and attn_w.shape == (B, H, S, S)
    # bf16 matmul operands -> loosened tolerance vs f32 reference.
    assert jnp.allclose(attn_w, ref_w, atol=2e-2, rtol=2e-2), \
        float(jnp.max(jnp.abs(attn_w - ref_w)))
    assert jnp.allclose(out, ref_out, atol=4e-2, rtol=4e-2), \
        float(jnp.max(jnp.abs(out - ref_out)))

    print("KERNEL_OK")
</pallas_src>

<mosaic_0001>
module attributes {stable_mosaic.version = 11 : i64} {
  func.func @qkv_proj_kernel(%arg0: i32, %arg1: i32, %arg2: memref<1x8x32xbf16, #tpu.memory_space<vmem>>, %arg3: memref<32x96xbf16, #tpu.memory_space<vmem>>, %arg4: memref<1x96xf32, #tpu.memory_space<vmem>>, %arg5: memref<1x4x8x8xbf16, #tpu.memory_space<vmem>>, %arg6: memref<1x4x8x8xbf16, #tpu.memory_space<vmem>>, %arg7: memref<1x4x8x8xbf16, #tpu.memory_space<vmem>>) attributes {dimension_semantics = [#tpu.dimension_semantics<parallel>, #tpu.dimension_semantics<parallel>], iteration_bounds = array<i64: 2, 1>, scalar_prefetch = 0 : i64, scratch_operands = 0 : i64, tpu.core_type = #tpu.core_type<tc>, window_params = [{transform_indices = @transform_0, window_bounds = array<i64: 1, 8, 32>}, {pipeline_mode = #tpu.pipeline_mode<synchronous>, transform_indices = @transform_1, window_bounds = array<i64: 32, 96>}, {pipeline_mode = #tpu.pipeline_mode<synchronous>, transform_indices = @transform_2, window_bounds = array<i64: 1, 96>}, {transform_indices = @transform_3, window_bounds = array<i64: 1, 4, 8, 8>}, {transform_indices = @transform_4, window_bounds = array<i64: 1, 4, 8, 8>}, {transform_indices = @transform_5, window_bounds = array<i64: 1, 4, 8, 8>}]} {
    %c0 = arith.constant 0 : index
    %c0_0 = arith.constant 0 : index
    %0 = vector.load %arg3[%c0, %c0_0] : memref<32x96xbf16, #tpu.memory_space<vmem>>, vector<32x32xbf16>
    %c0_1 = arith.constant 0 : index
    %c0_2 = arith.constant 0 : index
    %c0_3 = arith.constant 0 : index
    %1 = vector.load %arg2[%c0_1, %c0_2, %c0_3] : memref<1x8x32xbf16, #tpu.memory_space<vmem>>, vector<1x8x32xbf16>
    %2 = vector.shape_cast %1 : vector<1x8x32xbf16> to vector<8x32xbf16>
    %cst = arith.constant dense<0.000000e+00> : vector<8x32xf32>
    %3 = tpu.matmul %2, %0, %cst {dimension_numbers = #tpu.dot_dimension_numbers<[1], [0], [0], [1], [0, 0, 1, 1], [], []>} : vector<8x32xbf16>, vector<32x32xbf16>, vector<8x32xf32> -> vector<8x32xf32>
    %c0_4 = arith.constant 0 : index
    %c0_5 = arith.constant 0 : index
    %4 = vector.load %arg4[%c0_4, %c0_5] : memref<1x96xf32, #tpu.memory_space<vmem>>, vector<1x32xf32>
    %5 = vector.broadcast %4 : vector<1x32xf32> to vector<8x32xf32>
    %6 = arith.addf %3, %5 : vector<8x32xf32>
    %7 = arith.truncf %6 : vector<8x32xf32> to vector<8x32xbf16>
    %8 = vector.extract_strided_slice %7 {offsets = [0, 0], sizes = [8, 8], strides = [1, 1]} : vector<8x32xbf16> to vector<8x8xbf16>
    %c0_6 = arith.constant 0 : index
    %c0_7 = arith.constant 0 : index
    %c0_8 = arith.constant 0 : index
    %c0_9 = arith.constant 0 : index
    %9 = vector.load %arg5[%c0_6, %c0_7, %c0_8, %c0_9] : memref<1x4x8x8xbf16, #tpu.memory_space<vmem>>, vector<1x1x8x8xbf16>
    %10 = vector.shape_cast %9 : vector<1x1x8x8xbf16> to vector<8x8xbf16>
    %11 = vector.shape_cast %8 : vector<8x8xbf16> to vector<1x1x8x8xbf16>
    tpu.vector_store %arg5[%c0_6, %c0_7, %c0_8, %c0_9], %11 {strides = array<i32>} : memref<1x4x8x8xbf16, #tpu.memory_space<vmem>>, vector<1x1x8x8xbf16>,
    %12 = vector.extract_strided_slice %7 {offsets = [0, 8], sizes = [8, 8], strides = [1, 1]} : vector<8x32xbf16> to vector<8x8xbf16>
    %c0_10 = arith.constant 0 : index
    %c1 = arith.constant 1 : index
    %c0_11 = arith.constant 0 : index
    %c0_12 = arith.constant 0 : index
    %13 = vector.load %arg5[%c0_10, %c1, %c0_11, %c0_12] : memref<1x4x8x8xbf16, #tpu.memory_space<vmem>>, vector<1x1x8x8xbf16>
    %14 = vector.shape_cast %13 : vector<1x1x8x8xbf16> to vector<8x8xbf16>
    %15 = vector.shape_cast %12 : vector<8x8xbf16> to vector<1x1x8x8xbf16>
    tpu.vector_store %arg5[%c0_10, %c1, %c0_11, %c0_12], %15 {strides = array<i32>} : memref<1x4x8x8xbf16, #tpu.memory_space<vmem>>, vector<1x1x8x8xbf16>,
    %16 = vector.extract_strided_slice %7 {offsets = [0, 16], sizes = [8, 8], strides = [1, 1]} : vector<8x32xbf16> to vector<8x8xbf16>
    %c0_13 = arith.constant 0 : index
    %c2 = arith.constant 2 : index
    %c0_14 = arith.constant 0 : index
    %c0_15 = arith.constant 0 : index
    %17 = vector.load %arg5[%c0_13, %c2, %c0_14, %c0_15] : memref<1x4x8x8xbf16, #tpu.memory_space<vmem>>, vector<1x1x8x8xbf16>
    %18 = vector.shape_cast %17 : vector<1x1x8x8xbf16> to vector<8x8xbf16>
    %19 = vector.shape_cast %16 : vector<8x8xbf16> to vector<1x1x8x8xbf16>
    tpu.vector_store %arg5[%c0_13, %c2, %c0_14, %c0_15], %19 {strides = array<i32>} : memref<1x4x8x8xbf16, #tpu.memory_space<vmem>>, vector<1x1x8x8xbf16>,
    %20 = vector.extract_strided_slice %7 {offsets = [0, 24], sizes = [8, 8], strides = [1, 1]} : vector<8x32xbf16> to vector<8x8xbf16>
    %c0_16 = arith.constant 0 : index
    %c3 = arith.constant 3 : index
    %c0_17 = arith.constant 0 : index
    %c0_18 = arith.constant 0 : index
    %21 = vector.load %arg5[%c0_16, %c3, %c0_17, %c0_18] : memref<1x4x8x8xbf16, #tpu.memory_space<vmem>>, vector<1x1x8x8xbf16>
    %22 = vector.shape_cast %21 : vector<1x1x8x8xbf16> to vector<8x8xbf16>
    %23 = vector.shape_cast %20 : vector<8x8xbf16> to vector<1x1x8x8xbf16>
    tpu.vector_store %arg5[%c0_16, %c3, %c0_17, %c0_18], %23 {strides = array<i32>} : memref<1x4x8x8xbf16, #tpu.memory_space<vmem>>, vector<1x1x8x8xbf16>,
    %c0_19 = arith.constant 0 : index
    %c32 = arith.constant 32 : index
    %24 = vector.load %arg3[%c0_19, %c32] : memref<32x96xbf16, #tpu.memory_space<vmem>>, vector<32x32xbf16>
    %c0_20 = arith.constant 0 : index
    %c0_21 = arith.constant 0 : index
    %c0_22 = arith.constant 0 : index
    %25 = vector.load %arg2[%c0_20, %c0_21, %c0_22] : memref<1x8x32xbf16, #tpu.memory_space<vmem>>, vector<1x8x32xbf16>
    %26 = vector.shape_cast %25 : vector<1x8x32xbf16> to vector<8x32xbf16>
    %cst_23 = arith.constant dense<0.000000e+00> : vector<8x32xf32>
    %27 = tpu.matmul %26, %24, %cst_23 {dimension_numbers = #tpu.dot_dimension_numbers<[1], [0], [0], [1], [0, 0, 1, 1], [], []>} : vector<8x32xbf16>, vector<32x32xbf16>, vector<8x32xf32> -> vector<8x32xf32>
    %c0_24 = arith.constant 0 : index
    %c32_25 = arith.constant 32 : index
    %28 = vector.load %arg4[%c0_24, %c32_25] : memref<1x96xf32, #tpu.memory_space<vmem>>, vector<1x32xf32>
    %29 = vector.broadcast %28 : vector<1x32xf32> to vector<8x32xf32>
    %30 = arith.addf %27, %29 : vector<8x32xf32>
    %31 = arith.truncf %30 : vector<8x32xf32> to vector<8x32xbf16>
    %32 = vector.extract_strided_slice %31 {offsets = [0, 0], sizes = [8, 8], strides = [1, 1]} : vector<8x32xbf16> to vector<8x8xbf16>
    %c0_26 = arith.constant 0 : index
    %c0_27 = arith.constant 0 : index
    %c0_28 = arith.constant 0 : index
    %c0_29 = arith.constant 0 : index
    %33 = vector.load %arg6[%c0_26, %c0_27, %c0_28, %c0_29] : memref<1x4x8x8xbf16, #tpu.memory_space<vmem>>, vector<1x1x8x8xbf16>
    %34 = vector.shape_cast %33 : vector<1x1x8x8xbf16> to vector<8x8xbf16>
    %35 = vector.shape_cast %32 : vector<8x8xbf16> to vector<1x1x8x8xbf16>
    tpu.vector_store %arg6[%c0_26, %c0_27, %c0_28, %c0_29], %35 {strides = array<i32>} : memref<1x4x8x8xbf16, #tpu.memory_space<vmem>>, vector<1x1x8x8xbf16>,
    %36 = vector.extract_strided_slice %31 {offsets = [0, 8], sizes = [8, 8], strides = [1, 1]} : vector<8x32xbf16> to vector<8x8xbf16>
    %c0_30 = arith.constant 0 : index
    %c1_31 = arith.constant 1 : index
    %c0_32 = arith.constant 0 : index
    %c0_33 = arith.constant 0 : index
    %37 = vector.load %arg6[%c0_30, %c1_31, %c0_32, %c0_33] : memref<1x4x8x8xbf16, #tpu.memory_space<vmem>>, vector<1x1x8x8xbf16>
    %38 = vector.shape_cast %37 : vector<1x1x8x8xbf16> to vector<8x8xbf16>
    %39 = vector.shape_cast %36 : vector<8x8xbf16> to vector<1x1x8x8xbf16>
    tpu.vector_store %arg6[%c0_30, %c1_31, %c0_32, %c0_33], %39 {strides = array<i32>} : memref<1x4x8x8xbf16, #tpu.memory_space<vmem>>, vector<1x1x8x8xbf16>,
    %40 = vector.extract_strided_slice %31 {offsets = [0, 16], sizes = [8, 8], strides = [1, 1]} : vector<8x32xbf16> to vector<8x8xbf16>
    %c0_34 = arith.constant 0 : index
    %c2_35 = arith.constant 2 : index
    %c0_36 = arith.constant 0 : index
    %c0_37 = arith.constant 0 : index
    %41 = vector.load %arg6[%c0_34, %c2_35, %c0_36, %c0_37] : memref<1x4x8x8xbf16, #tpu.memory_space<vmem>>, vector<1x1x8x8xbf16>
    %42 = vector.shape_cast %41 : vector<1x1x8x8xbf16> to vector<8x8xbf16>
    %43 = vector.shape_cast %40 : vector<8x8xbf16> to vector<1x1x8x8xbf16>
    tpu.vector_store %arg6[%c0_34, %c2_35, %c0_36, %c0_37], %43 {strides = array<i32>} : memref<1x4x8x8xbf16, #tpu.memory_space<vmem>>, vector<1x1x8x8xbf16>,
    %44 = vector.extract_strided_slice %31 {offsets = [0, 24], sizes = [8, 8], strides = [1, 1]} : vector<8x32xbf16> to vector<8x8xbf16>
    %c0_38 = arith.constant 0 : index
    %c3_39 = arith.constant 3 : index
    %c0_40 = arith.constant 0 : index
    %c0_41 = arith.constant 0 : index
    %45 = vector.load %arg6[%c0_38, %c3_39, %c0_40, %c0_41] : memref<1x4x8x8xbf16, #tpu.memory_space<vmem>>, vector<1x1x8x8xbf16>
    %46 = vector.shape_cast %45 : vector<1x1x8x8xbf16> to vector<8x8xbf16>
    %47 = vector.shape_cast %44 : vector<8x8xbf16> to vector<1x1x8x8xbf16>
    tpu.vector_store %arg6[%c0_38, %c3_39, %c0_40, %c0_41], %47 {strides = array<i32>} : memref<1x4x8x8xbf16, #tpu.memory_space<vmem>>, vector<1x1x8x8xbf16>,
    %c0_42 = arith.constant 0 : index
    %c64 = arith.constant 64 : index
    %48 = vector.load %arg3[%c0_42, %c64] : memref<32x96xbf16, #tpu.memory_space<vmem>>, vector<32x32xbf16>
    %c0_43 = arith.constant 0 : index
    %c0_44 = arith.constant 0 : index
    %c0_45 = arith.constant 0 : index
    %49 = vector.load %arg2[%c0_43, %c0_44, %c0_45] : memref<1x8x32xbf16, #tpu.memory_space<vmem>>, vector<1x8x32xbf16>
    %50 = vector.shape_cast %49 : vector<1x8x32xbf16> to vector<8x32xbf16>
    %cst_46 = arith.constant dense<0.000000e+00> : vector<8x32xf32>
    %51 = tpu.matmul %50, %48, %cst_46 {dimension_numbers = #tpu.dot_dimension_numbers<[1], [0], [0], [1], [0, 0, 1, 1], [], []>} : vector<8x32xbf16>, vector<32x32xbf16>, vector<8x32xf32> -> vector<8x32xf32>
    %c0_47 = arith.constant 0 : index
    %c64_48 = arith.constant 64 : index
    %52 = vector.load %arg4[%c0_47, %c64_48] : memref<1x96xf32, #tpu.memory_space<vmem>>, vector<1x32xf32>
    %53 = vector.broadcast %52 : vector<1x32xf32> to vector<8x32xf32>
    %54 = arith.addf %51, %53 : vector<8x32xf32>
    %55 = arith.truncf %54 : vector<8x32xf32> to vector<8x32xbf16>
    %56 = vector.extract_strided_slice %55 {offsets = [0, 0], sizes = [8, 8], strides = [1, 1]} : vector<8x32xbf16> to vector<8x8xbf16>
    %c0_49 = arith.constant 0 : index
    %c0_50 = arith.constant 0 : index
    %c0_51 = arith.constant 0 : index
    %c0_52 = arith.constant 0 : index
    %57 = vector.load %arg7[%c0_49, %c0_50, %c0_51, %c0_52] : memref<1x4x8x8xbf16, #tpu.memory_space<vmem>>, vector<1x1x8x8xbf16>
    %58 = vector.shape_cast %57 : vector<1x1x8x8xbf16> to vector<8x8xbf16>
    %59 = vector.shape_cast %56 : vector<8x8xbf16> to vector<1x1x8x8xbf16>
    tpu.vector_store %arg7[%c0_49, %c0_50, %c0_51, %c0_52], %59 {strides = array<i32>} : memref<1x4x8x8xbf16, #tpu.memory_space<vmem>>, vector<1x1x8x8xbf16>,
    %60 = vector.extract_strided_slice %55 {offsets = [0, 8], sizes = [8, 8], strides = [1, 1]} : vector<8x32xbf16> to vector<8x8xbf16>
    %c0_53 = arith.constant 0 : index
    %c1_54 = arith.constant 1 : index
    %c0_55 = arith.constant 0 : index
    %c0_56 = arith.constant 0 : index
    %61 = vector.load %arg7[%c0_53, %c1_54, %c0_55, %c0_56] : memref<1x4x8x8xbf16, #tpu.memory_space<vmem>>, vector<1x1x8x8xbf16>
    %62 = vector.shape_cast %61 : vector<1x1x8x8xbf16> to vector<8x8xbf16>
    %63 = vector.shape_cast %60 : vector<8x8xbf16> to vector<1x1x8x8xbf16>
    tpu.vector_store %arg7[%c0_53, %c1_54, %c0_55, %c0_56], %63 {strides = array<i32>} : memref<1x4x8x8xbf16, #tpu.memory_space<vmem>>, vector<1x1x8x8xbf16>,
    %64 = vector.extract_strided_slice %55 {offsets = [0, 16], sizes = [8, 8], strides = [1, 1]} : vector<8x32xbf16> to vector<8x8xbf16>
    %c0_57 = arith.constant 0 : index
    %c2_58 = arith.constant 2 : index
    %c0_59 = arith.constant 0 : index
    %c0_60 = arith.constant 0 : index
    %65 = vector.load %arg7[%c0_57, %c2_58, %c0_59, %c0_60] : memref<1x4x8x8xbf16, #tpu.memory_space<vmem>>, vector<1x1x8x8xbf16>
    %66 = vector.shape_cast %65 : vector<1x1x8x8xbf16> to vector<8x8xbf16>
    %67 = vector.shape_cast %64 : vector<8x8xbf16> to vector<1x1x8x8xbf16>
    tpu.vector_store %arg7[%c0_57, %c2_58, %c0_59, %c0_60], %67 {strides = array<i32>} : memref<1x4x8x8xbf16, #tpu.memory_space<vmem>>, vector<1x1x8x8xbf16>,
    %68 = vector.extract_strided_slice %55 {offsets = [0, 24], sizes = [8, 8], strides = [1, 1]} : vector<8x32xbf16> to vector<8x8xbf16>
    %c0_61 = arith.constant 0 : index
    %c3_62 = arith.constant 3 : index
    %c0_63 = arith.constant 0 : index
    %c0_64 = arith.constant 0 : index
    %69 = vector.load %arg7[%c0_61, %c3_62, %c0_63, %c0_64] : memref<1x4x8x8xbf16, #tpu.memory_space<vmem>>, vector<1x1x8x8xbf16>
    %70 = vector.shape_cast %69 : vector<1x1x8x8xbf16> to vector<8x8xbf16>
    %71 = vector.shape_cast %68 : vector<8x8xbf16> to vector<1x1x8x8xbf16>
    tpu.vector_store %arg7[%c0_61, %c3_62, %c0_63, %c0_64], %71 {strides = array<i32>} : memref<1x4x8x8xbf16, #tpu.memory_space<vmem>>, vector<1x1x8x8xbf16>,
    return
  }
  func.func @transform_0(%arg0: i32, %arg1: i32) -> (i32, i32, i32) {
    %c0_i32 = arith.constant 0 : i32
    %c0_i32_0 = arith.constant 0 : i32
    return %arg0, %arg1, %c0_i32 : i32, i32, i32
  }
  func.func @transform_1(%arg0: i32, %arg1: i32) -> (i32, i32) {
    %c0_i32 = arith.constant 0 : i32
    %c0_i32_0 = arith.constant 0 : i32
    %c0_i32_1 = arith.constant 0 : i32
    return %c0_i32, %c0_i32_0 : i32, i32
  }
  func.func @transform_2(%arg0: i32, %arg1: i32) -> (i32, i32) {
    %c0_i32 = arith.constant 0 : i32
    %c0_i32_0 = arith.constant 0 : i32
    %c0_i32_1 = arith.constant 0 : i32
    return %c0_i32, %c0_i32_0 : i32, i32
  }
  func.func @transform_3(%arg0: i32, %arg1: i32) -> (i32, i32, i32, i32) {
    %c0_i32 = arith.constant 0 : i32
    %c0_i32_0 = arith.constant 0 : i32
    %c0_i32_1 = arith.constant 0 : i32
    return %arg0, %c0_i32, %arg1, %c0_i32_0 : i32, i32, i32, i32
  }
  func.func @transform_4(%arg0: i32, %arg1: i32) -> (i32, i32, i32, i32) {
    %c0_i32 = arith.constant 0 : i32
    %c0_i32_0 = arith.constant 0 : i32
    %c0_i32_1 = arith.constant 0 : i32
    return %arg0, %c0_i32, %arg1, %c0_i32_0 : i32, i32, i32, i32
  }
  func.func @transform_5(%arg0: i32, %arg1: i32) -> (i32, i32, i32, i32) {
    %c0_i32 = arith.constant 0 : i32
    %c0_i32_0 = arith.constant 0 : i32
    %c0_i32_1 = arith.constant 0 : i32
    return %arg0, %c0_i32, %arg1, %c0_i32_0 : i32, i32, i32, i32
  }
}

</mosaic_0001>

<llo_original>
// kernel: tpu_custom_call.1
$region0: #{tpu_custom_call.1}
  #allocation0 [shape = 'u32[]', space=smem, size = 0x4, offset = 0x4, fixed_abs, tag = 'smem constant byte address 0x4 - core index']
  #allocation1 [shape = 'u32[144,128]{1,0:T(1,128)}', space=vmem, size = 0x12000, scoped, tag = 'internal scratch']
  %s0 = inlined_call_operand.hbm [shape: bf16[2,8,32], index: 0, kind: input, shape index: {}]
  %s1 = inlined_call_operand.hbm [shape: bf16[32,96], index: 1, kind: input, shape index: {}]
  %s2 = inlined_call_operand.vmem [shape: f32[1,96], index: 2, kind: input, shape index: {}]
  %s3 = inlined_call_operand.hbm [shape: bf16[2,4,8,8], index: 3, kind: output, shape index: {0}]
  %s4 = inlined_call_operand.hbm [shape: bf16[2,4,8,8], index: 4, kind: output, shape index: {1}]
  %s5 = inlined_call_operand.hbm [shape: bf16[2,4,8,8], index: 5, kind: output, shape index: {2}]
  %6 = xla_tuple %s3, %s4, %s5
  %s7 = sld [smem:[#allocation0]]
  $region69: #{tpu_custom_call.1} parent=0
    _
  %s9 = ssub.s32 1, %s7
  %s10 = scalar_select 0, %s9, %s7
  $region1: #{tpu_custom_call.1} parent=0
    #allocation2 [shape = 'u8[4096]{0}', space=vmem, size = 0x1000, scoped, tag = 'input window, operand 0']
    #allocation3 [shape = 's32[2]{0}', space=sflag, size = 0x8, scoped, tag = 'scoped memory for tpu_custom_call.1']
    #allocation4 [shape = 's32[2]{0}', space=sflag, size = 0x8, scoped, tag = 'scoped memory for tpu_custom_call.1']
    #allocation5 [shape = 'u8[8192]{0}', space=vmem, size = 0x2000, scoped, tag = 'input window, operand 1, single buffered']
    #allocation6 [shape = 's32[1]{0}', space=sflag, size = 0x4, scoped, tag = 'scoped memory for tpu_custom_call.1']
    #allocation7 [shape = 'u8[16384]{0}', space=vmem, size = 0x4000, scoped, tag = 'output window, operand 0']
    #allocation8 [shape = 'u8[16384]{0}', space=vmem, size = 0x4000, scoped, tag = 'output window, operand 1']
    #allocation9 [shape = 's32[2]{0}', space=sflag, size = 0x8, scoped, tag = 'scoped memory for tpu_custom_call.1']
    #allocation10 [shape = 'u8[16384]{0}', space=vmem, size = 0x4000, scoped, tag = 'output window, operand 2']
    %11 = vsyncpa [#allocation3], 0
    %s12 = scalar_lea.sflag [#allocation3], 1
    %13 = vsyncpa %s12, 0
    %14 = vsyncpa [#allocation6], 0
    %15 = vsyncpa [#allocation4], 0
    %s16 = scalar_lea.sflag [#allocation4], 1
    %17 = vsyncpa %s16, 0
    %18 = vsyncpa [#allocation9], 0
    %s19 = scalar_lea.sflag [#allocation9], 1
    %20 = vsyncpa %s19, 0
    loop: start=0, step=1, limit=4
    $region2: #{tpu_custom_call.1} parent=1 // loop_pre_header
      _
    $region3: #{tpu_custom_call.1} parent=1 // loop_header
      %s22 = sphi 0, %s26
      %p23 = scmp.ge.s32.totalorder %s22, 4
      %s29 = sphi 0, %s41
      %s30 = sphi 0, %s37
      %s31 = sphi 0, %s29
      %s32 = sphi 0, %s30
      %s33 = sphi 0, %s31
      %s34 = sphi 0, %s32
      %s46 = sphi 0, %s48
      %s49 = sphi 0, %s46
      %s50 = sphi 0, %s49
      %s66 = sphi 0, %s50
      %s70 = sphi 0, %s70
      %s72 = sphi 0, %s70
      %s73 = sphi 0, %s72
      %s87 = sphi 0, %s73
      %s91 = sphi 0, %s91
      %s93 = sphi 0, %s91
      %s94 = sphi 0, %s93
      %s108 = sphi 0, %s94
      %s116 = sphi 0, %s118
      %s119 = sphi 0, %s116
      %s120 = sphi 0, %s119
      %s136 = sphi 0, %s120
      %s144 = sphi 0, %s146
      %s147 = sphi 0, %s144
      %s148 = sphi 0, %s147
      %s164 = sphi 0, %s148
      %s172 = sphi 0, %s174
      %s175 = sphi 0, %s172
      %s176 = sphi 0, %s175
      %s192 = sphi 0, %s176
    $region4: #{tpu_custom_call.1} parent=1 // loop_header_branch
      %25 = sbr.rel (%p23) target = $region8
    $region5: #{tpu_custom_call.1} parent=1 // loop_body
      %s27 = ssub.s32 %s22, 1
      %s28 = ssub.s32 %s22, 2
      %s35 = sadd.s32 1, %s30
      %p36 = scmp.ge.s32.totalorder %s35, 1
      %s37 = scalar_select %p36, 0, %s35
      %s38 = sadd.s32 1, %s29
      %s39 = scalar_select %p36, %s38, %s29
      %p40 = scmp.ge.s32.totalorder %s39, 2
      %s41 = scalar_select %p40, 0, %s39
      %s42 = ssub.s32 %s29, %s41
      %s43 = ssub.s32 %s30, %s37
      %s44 = sor.u32 %s42, %s43
      %p45 = scmp.eq.s32.totalorder %s44, 0
      %s47 = sadd.s32 %s46, 1
      %s48 = scalar_select %p45, %s46, %s47
      %p51 = pneg %p45
      %p52 = scmp.eq.s32.totalorder %s22, 1
      %p53 = por %p51, %p52
      %p54 = scmp.ne.s32.totalorder %s46, %s49
      %p55 = scmp.eq.s32.totalorder %s22, 0
      %p56 = por %p54, %p55
      %p57 = scmp.ne.s32.totalorder %s46, %s49
      %p58 = scmp.eq.s32.totalorder %s27, 1
      %p59 = por %p57, %p58
      %p60 = scmp.ne.s32.totalorder %s49, %s50
      %p61 = scmp.eq.s32.totalorder %s27, 0
      %p62 = por %p60, %p61
      %p63 = scmp.ne.s32.totalorder %s49, %s50
      %p64 = scmp.eq.s32.totalorder %s28, 1
      %p65 = por %p63, %p64
      %p67 = scmp.ne.s32.totalorder %s50, %s66
      %p68 = scmp.eq.s32.totalorder %s28, 0
      %p69 = por %p67, %p68
      %s71 = sadd.s32 %s70, 1
      %p74 = scmp.eq.s32.totalorder %s22, 1
      %p75 = scmp.ne.s32.totalorder %s70, %s72
      %p76 = scmp.eq.s32.totalorder %s22, 0
      %p77 = por %p75, %p76
      %p78 = scmp.ne.s32.totalorder %s70, %s72
      %p79 = scmp.eq.s32.totalorder %s27, 1
      %p80 = por %p78, %p79
      %p81 = scmp.ne.s32.totalorder %s72, %s73
      %p82 = scmp.eq.s32.totalorder %s27, 0
      %p83 = por %p81, %p82
      %p84 = scmp.ne.s32.totalorder %s72, %s73
      %p85 = scmp.eq.s32.totalorder %s28, 1
      %p86 = por %p84, %p85
      %p88 = scmp.ne.s32.totalorder %s73, %s87
      %p89 = scmp.eq.s32.totalorder %s28, 0
      %p90 = por %p88, %p89
      %s92 = sadd.s32 %s91, 1
      %p95 = scmp.eq.s32.totalorder %s22, 1
      %p96 = scmp.ne.s32.totalorder %s91, %s93
      %p97 = scmp.eq.s32.totalorder %s22, 0
      %p98 = por %p96, %p97
      %p99 = scmp.ne.s32.totalorder %s91, %s93
      %p100 = scmp.eq.s32.totalorder %s27, 1
      %p101 = por %p99, %p100
      %p102 = scmp.ne.s32.totalorder %s93, %s94
      %p103 = scmp.eq.s32.totalorder %s27, 0
      %p104 = por %p102, %p103
      %p105 = scmp.ne.s32.totalorder %s93, %s94
      %p106 = scmp.eq.s32.totalorder %s28, 1
      %p107 = por %p105, %p106
      %p109 = scmp.ne.s32.totalorder %s94, %s108
      %p110 = scmp.eq.s32.totalorder %s28, 0
      %p111 = por %p109, %p110
      %s112 = ssub.s32 %s29, %s41
      %s113 = ssub.s32 %s30, %s37
      %s114 = sor.u32 %s112, %s113
      %p115 = scmp.eq.s32.totalorder %s114, 0
      %s117 = sadd.s32 %s116, 1
      %s118 = scalar_select %p115, %s116, %s117
      %p121 = pneg %p115
      %p122 = scmp.eq.s32.totalorder %s22, 1
      %p123 = por %p121, %p122
      %p124 = scmp.ne.s32.totalorder %s116, %s119
      %p125 = scmp.eq.s32.totalorder %s22, 0
      %p126 = por %p124, %p125
      %p127 = scmp.ne.s32.totalorder %s116, %s119
      %p128 = scmp.eq.s32.totalorder %s27, 1
      %p129 = por %p127, %p128
      %p130 = scmp.ne.s32.totalorder %s119, %s120
      %p131 = scmp.eq.s32.totalorder %s27, 0
      %p132 = por %p130, %p131
      %p133 = scmp.ne.s32.totalorder %s119, %s120
      %p134 = scmp.eq.s32.totalorder %s28, 1
      %p135 = por %p133, %p134
      %p137 = scmp.ne.s32.totalorder %s120, %s136
      %p138 = scmp.eq.s32.totalorder %s28, 0
      %p139 = por %p137, %p138
      %s140 = ssub.s32 %s29, %s41
      %s141 = ssub.s32 %s30, %s37
      %s142 = sor.u32 %s140, %s141
      %p143 = scmp.eq.s32.totalorder %s142, 0
      %s145 = sadd.s32 %s144, 1
      %s146 = scalar_select %p143, %s144, %s145
      %p149 = pneg %p143
      %p150 = scmp.eq.s32.totalorder %s22, 1
      %p151 = por %p149, %p150
      %p152 = scmp.ne.s32.totalorder %s144, %s147
      %p153 = scmp.eq.s32.totalorder %s22, 0
      %p154 = por %p152, %p153
      %p155 = scmp.ne.s32.totalorder %s144, %s147
      %p156 = scmp.eq.s32.totalorder %s27, 1
      %p157 = por %p155, %p156
      %p158 = scmp.ne.s32.totalorder %s147, %s148
      %p159 = scmp.eq.s32.totalorder %s27, 0
      %p160 = por %p158, %p159
      %p161 = scmp.ne.s32.totalorder %s147, %s148
      %p162 = scmp.eq.s32.totalorder %s28, 1
      %p163 = por %p161, %p162
      %p165 = scmp.ne.s32.totalorder %s148, %s164
      %p166 = scmp.eq.s32.totalorder %s28, 0
      %p167 = por %p165, %p166
      %s168 = ssub.s32 %s29, %s41
      %s169 = ssub.s32 %s30, %s37
      %s170 = sor.u32 %s168, %s169
      %p171 = scmp.eq.s32.totalorder %s170, 0
      %s173 = sadd.s32 %s172, 1
      %s174 = scalar_select %p171, %s172, %s173
      %p177 = pneg %p171
      %p178 = scmp.eq.s32.totalorder %s22, 1
      %p179 = por %p177, %p178
      %p180 = scmp.ne.s32.totalorder %s172, %s175
      %p181 = scmp.eq.s32.totalorder %s22, 0
      %p182 = por %p180, %p181
      %p183 = scmp.ne.s32.totalorder %s172, %s175
      %p184 = scmp.eq.s32.totalorder %s27, 1
      %p185 = por %p183, %p184
      %p186 = scmp.ne.s32.totalorder %s175, %s176
      %p187 = scmp.eq.s32.totalorder %s27, 0
      %p188 = por %p186, %p187
      %p189 = scmp.ne.s32.totalorder %s175, %s176
      %p190 = scmp.eq.s32.totalorder %s28, 1
      %p191 = por %p189, %p190
      %p193 = scmp.ne.s32.totalorder %s176, %s192
      %p194 = scmp.eq.s32.totalorder %s28, 0
      %p195 = por %p193, %p194
      %p196 = scmp.le.s32.totalorder 1, %s22
      %p197 = scmp.lt.s32.totalorder %s22, 3
      %p198 = pnand %p196, %p197
      %p199 = pneg %p198
      // Predicated region
      $region9: #{tpu_custom_call.1} parent=5 // pred_check
        _
      $region10: #{tpu_custom_call.1} parent=5 // pred_check_branch
        %201 = sbr.rel (%p198) target = $region12
      $region11: #{tpu_custom_call.1} parent=5 // pred_region
        %s202 = ssub.s32 %s22, 1
        // Predicated region
        $region13: #{tpu_custom_call.1} parent=11 // pred_check
          %p203 = pneg %p83
        $region14: #{tpu_custom_call.1} parent=11 // pred_check_branch
          %205 = sbr.rel (%p203) target = $region16
        $region15: #{tpu_custom_call.1} parent=11 // pred_region
          %s207 = ssub.s32 256, 256
          %208 = vsyncadd [#allocation6], %s207
          %s209 = sshll.u32 [#allocation5], 4
          %s210 = int_to_ptr.vmem [resolvable:$true] %s209
          %215 = dma.hbm_to_vmem [thread:$0]  %s1, 256, %s210, [#allocation6], 64, 64, 4
        $region16: #{tpu_custom_call.1} parent=11 // pred_fallthru
          _
        // Predicated region
        $region17: #{tpu_custom_call.1} parent=11 // pred_check
          %p216 = pneg %p104
        $region18: #{tpu_custom_call.1} parent=11 // pred_check_branch
          %218 = sbr.rel (%p216) target = $region20
        $region19: #{tpu_custom_call.1} parent=11 // pred_region
          _
        $region20: #{tpu_custom_call.1} parent=11 // pred_fallthru
          _
      $region12: #{tpu_custom_call.1} parent=5 // pred_fallthru
        _
      %p219 = scmp.lt.s32.totalorder %s22, 2
      // Predicated region
      $region21: #{tpu_custom_call.1} parent=5 // pred_check
        %p220 = pneg %p219
      $region22: #{tpu_custom_call.1} parent=5 // pred_check_branch
        %222 = sbr.rel (%p220) target = $region24
      $region23: #{tpu_custom_call.1} parent=5 // pred_region
        // Predicated region
        $region25: #{tpu_custom_call.1} parent=23 // pred_check
          %p223 = pneg %p56
        $region26: #{tpu_custom_call.1} parent=23 // pred_check_branch
          %225 = sbr.rel (%p223) target = $region28
        $region27: #{tpu_custom_call.1} parent=23 // pred_region
          %s226 = sand.u32 %s46, 1
          %s227 = scalar_lea.sflag [#allocation3], %s226
          %s228 = sand.u32 %s46, 1
          %s229 = smul.addr %s228, 4
          %s230 = scalar_lea.vmem [#allocation2], %s229
          %s232 = ssub.s32 64, 64
          %233 = vsyncadd %s227, %s232
          %s234 = sadd.s32 %s30, %s29
          %s235 = smul.addr %s234, 64
          %s236 = scalar_lea.hbm %s0, %s235
          %s238 = sshll.u32 %s230, 4
          %s239 = int_to_ptr.vmem [resolvable:$true] %s238
          %241 = dma.hbm_to_vmem [thread:$0]  %s236, 64, %s239, %s227
        $region28: #{tpu_custom_call.1} parent=23 // pred_fallthru
          _
      $region24: #{tpu_custom_call.1} parent=5 // pred_fallthru
        _
      %p242 = scmp.le.s32.totalorder 1, %s22
      %p243 = scmp.lt.s32.totalorder %s22, 3
      %p244 = pnand %p242, %p243
      %p245 = pneg %p244
      // Predicated region
      $region29: #{tpu_custom_call.1} parent=5 // pred_check
        _
      $region30: #{tpu_custom_call.1} parent=5 // pred_check_branch
        %247 = sbr.rel (%p244) target = $region32
      $region31: #{tpu_custom_call.1} parent=5 // pred_region
        %s248 = ssub.s32 %s22, 1
        %s249 = sand.u32 %s49, 1
        %s250 = scalar_lea.sflag [#allocation3], %s249
        %s251 = sand.u32 %s49, 1
        %s252 = smul.addr %s251, 4
        %s253 = scalar_lea.vmem [#allocation2], %s252
        // Predicated region
        $region33: #{tpu_custom_call.1} parent=31 // pred_check
          %p254 = pneg %p62
        $region34: #{tpu_custom_call.1} parent=31 // pred_check_branch
          %256 = sbr.rel (%p254) target = $region36
        $region35: #{tpu_custom_call.1} parent=31 // pred_region
          %257 = dma.done %s250, 64
        $region36: #{tpu_custom_call.1} parent=31 // pred_fallthru
          _
        // Predicated region
        $region37: #{tpu_custom_call.1} parent=31 // pred_check
          %p258 = pneg %p83
        $region38: #{tpu_custom_call.1} parent=31 // pred_check_branch
          %260 = sbr.rel (%p258) target = $region40
        $region39: #{tpu_custom_call.1} parent=31 // pred_region
          %261 = dma.done [#allocation6], 256
        $region40: #{tpu_custom_call.1} parent=31 // pred_fallthru
          _
        %s262 = sand.u32 %s49, 1
        %s263 = scalar_lea.sflag [#allocation3], %s262
        %s264 = sand.u32 %s49, 1
        %s265 = smul.addr %s264, 4
        %s266 = scalar_lea.vmem [#allocation2], %s265
        %p267 = pneg %p62
        %p268 = pneg %p59
        %p269 = pneg %p83
        %p270 = pneg %p80
        %p271 = pneg %p104
        %p272 = pneg %p101
        %p273 = pneg %p132
        %p274 = pneg %p129
        %s275 = sand.u32 %s119, 1
        %s276 = scalar_lea.sflag [#allocation4], %s275
        %s277 = sand.u32 %s119, 1
        %s278 = smul.addr %s277, 16
        %s279 = scalar_lea.vmem [#allocation7], %s278
        %p280 = pneg %p160
        %p281 = pneg %p157
        %s282 = sand.u32 %s27, 1
        %s283 = scalar_lea.sflag [#allocation9], %s282
        %s284 = sand.u32 %s147, 1
        %s285 = smul.addr %s284, 16
        %s286 = scalar_lea.vmem [#allocation8], %s285
        %p287 = pneg %p188
        %p288 = pneg %p185
        %s289 = sand.u32 %s27, 1
        %s290 = scalar_lea.sflag [#allocation9], %s289
        %s291 = sand.u32 %s175, 1
        %s292 = smul.addr %s291, 16
        %s293 = scalar_lea.vmem [#allocation10], %s292
        %v295 = vld [vmem:[#allocation5] sm:$0xf]
        %v296 = vld [vmem:[#allocation5 + $0x4] sm:$0xf]
        %v297 = vld [vmem:[#allocation5 + $0x8] sm:$0xf]
        %v298 = vld [vmem:[#allocation5 + $0xc] sm:$0xf]
        %v299 = vld [vmem:[%s253] sm:$0xf]
        %v300 = vld [vmem:[%s2] sm:$0x1]
        %v302 = vlaneseq
        %v303 = vshrl.u32 %v302, 7
        %v304 = vsub.s32 0, %v303
        %v305 = vrot.slane %v300, %v304
        %v311 = vunpack.c.l.b16 %v295
        %v312 = vunpack.c.l.b16 %v296
        %v313 = vunpack.c.l.b16 %v297
        %v314 = vunpack.c.l.b16 %v298
        %v315 = vpack.c.b16 %v312, %v311
        %v316 = vpack.c.b16 %v314, %v313
        %vm319 = vcmask 261120
        %v321 = vsel %vm319, %v299, 0
        %323 = vmatprep.subr.bf16.mxu0 0
        %324 = vmatpush1.bf16.msra.mxu0 %v315
        %325 = vmatprep.subr.bf16.mxu0 0
        %326 = vmatpush1.bf16.msra.mxu0 %v316
        %327 = vmatprep.subr.bf16.mxu0 0
        %328 = vmatpush1.bf16.msra.mxu0 0
        %329 = vmatprep.subr.bf16.mxu0 0
        %330 = vmatpush1.bf16.msra.mxu0 0
        %331 = vmatprep.subr.bf16.mxu0 0
        %332 = vmatpush1.bf16.msra.mxu0 0
        %333 = vmatprep.subr.bf16.mxu0 0
        %334 = vmatpush1.bf16.msra.mxu0 0
        %335 = vmatprep.subr.bf16.mxu0 0
        %336 = vmatpush1.bf16.msra.mxu0 0
        %337 = vmatprep.subr.bf16.mxu0 0
        %338 = vmatpush1.bf16.msra.mxu0 0
        %339 = vmatprep.subr.bf16.mxu0 0
        %340 = vmatpush1.bf16.msra.mxu0 0
        %341 = vmatprep.subr.bf16.mxu0 0
        %342 = vmatpush1.bf16.msra.mxu0 0
        %343 = vmatprep.subr.bf16.mxu0 0
        %344 = vmatpush1.bf16.msra.mxu0 0
        %345 = vmatprep.subr.bf16.mxu0 0
        %346 = vmatpush1.bf16.msra.mxu0 0
        %347 = vmatprep.subr.bf16.mxu0 0
        %348 = vmatpush1.bf16.msra.mxu0 0
        %349 = vmatprep.subr.bf16.mxu0 0
        %350 = vmatpush1.bf16.msra.mxu0 0
        %351 = vmatprep.subr.bf16.mxu0 0
        %352 = vmatpush1.bf16.msra.mxu0 0
        %353 = vmatprep.subr.bf16.mxu0 0
        %354 = vmatpush1.bf16.msra.mxu0 0
        %355 = vmatprep.mubr.bf16.mxu0 0
        %356 = vmatmul.mubr.bf16.gmra.mrb[0].mxu0 %v321
        %v357 = vpop.f32.mrb[0].mxu0
        %v358 = vadd.f32 %v305, %v357
        %v359 = vpop.f32.mrb[0].mxu0
        %v360 = vpop.f32.mrb[0].mxu0
        %v361 = vpop.f32.mrb[0].mxu0
        %362 = vdwg.mxu0
        %v363 = vpack.c.bf16 %v358, %v358
        %vm364 = vcmask 60416
        %365 = vst.msk [vmem:[%s279] sm:$0xf] %vm364, %v363
        %v367 = vunpack.c.l.b16 %v363
        %v368 = vpack.c.b16 %v367, %v367
        %369 = vrot.lane.b32.xlu0 %v368, 120
        %v370 = vpop.permute.xlu0 %369
        %s372 = scalar_lea.vmem %s279, 4 [#allocation7]
        %373 = vst.msk [vmem:[%s372] sm:$0xf] %vm364, %v370
        %374 = vrot.lane.b32.xlu0 %v368, 112
        %v375 = vpop.permute.xlu0 %374
        %s377 = scalar_lea.vmem %s279, 8 [#allocation7]
        %378 = vst.msk [vmem:[%s377] sm:$0xf] %vm364, %v375
        %379 = vrot.lane.b32.xlu0 %v368, 104
        %v380 = vpop.permute.xlu0 %379
        %s382 = scalar_lea.vmem %s279, 12 [#allocation7]
        %383 = vst.msk [vmem:[%s382] sm:$0xf] %vm364, %v380
        %v384 = vld [vmem:[#allocation5] sm:$0xf]
        %v385 = vld [vmem:[#allocation5 + $0x4] sm:$0xf]
        %v386 = vld [vmem:[#allocation5 + $0x8] sm:$0xf]
        %v387 = vld [vmem:[#allocation5 + $0xc] sm:$0xf]
        %v388 = vld [vmem:[%s253] sm:$0xf]
        %v389 = vld [vmem:[%s2] sm:$0x1]
        %v391 = vlaneseq
        %v392 = vshrl.u32 %v391, 7
        %v393 = vsub.s32 0, %v392
        %v394 = vrot.slane %v389, %v393
        %v399 = vunpack.c.l.b16 %v384
        %v400 = vunpack.c.l.b16 %v385
        %v401 = vunpack.c.l.b16 %v386
        %v402 = vunpack.c.l.b16 %v387
        %v403 = vpack.c.b16 %v400, %v399
        %v404 = vpack.c.b16 %v402, %v401
        %405 = vrot.lane.b32.xlu0 %v403, 96
        %v406 = vpop.permute.xlu0 %405
        %407 = vrot.lane.b32.xlu0 %v404, 96
        %v408 = vpop.permute.xlu0 %407
        %411 = vrot.lane.b32.xlu0 %v394, 96
        %v412 = vpop.permute.xlu0 %411
        %v415 = vsel %vm319, %v388, 0
        %417 = vmatprep.subr.bf16.mxu0 0
        %418 = vmatpush1.bf16.msra.mxu0 %v406
        %419 = vmatprep.subr.bf16.mxu0 0
        %420 = vmatpush1.bf16.msra.mxu0 %v408
        %421 = vmatprep.subr.bf16.mxu0 0
        %422 = vmatpush1.bf16.msra.mxu0 0
        %423 = vmatprep.subr.bf16.mxu0 0
        %424 = vmatpush1.bf16.msra.mxu0 0
        %425 = vmatprep.subr.bf16.mxu0 0
        %426 = vmatpush1.bf16.msra.mxu0 0
        %427 = vmatprep.subr.bf16.mxu0 0
        %428 = vmatpush1.bf16.msra.mxu0 0
        %429 = vmatprep.subr.bf16.mxu0 0
        %430 = vmatpush1.bf16.msra.mxu0 0
        %431 = vmatprep.subr.bf16.mxu0 0
        %432 = vmatpush1.bf16.msra.mxu0 0
        %433 = vmatprep.subr.bf16.mxu0 0
        %434 = vmatpush1.bf16.msra.mxu0 0
        %435 = vmatprep.subr.bf16.mxu0 0
        %436 = vmatpush1.bf16.msra.mxu0 0
        %437 = vmatprep.subr.bf16.mxu0 0
        %438 = vmatpush1.bf16.msra.mxu0 0
        %439 = vmatprep.subr.bf16.mxu0 0
        %440 = vmatpush1.bf16.msra.mxu0 0
        %441 = vmatprep.subr.bf16.mxu0 0
        %442 = vmatpush1.bf16.msra.mxu0 0
        %443 = vmatprep.subr.bf16.mxu0 0
        %444 = vmatpush1.bf16.msra.mxu0 0
        %445 = vmatprep.subr.bf16.mxu0 0
        %446 = vmatpush1.bf16.msra.mxu0 0
        %447 = vmatprep.subr.bf16.mxu0 0
        %448 = vmatpush1.bf16.msra.mxu0 0
        %449 = vmatprep.mubr.bf16.mxu0 0
        %450 = vmatmul.mubr.bf16.gmra.mrb[0].mxu0 %v415
        %v451 = vpop.f32.mrb[0].mxu0
        %v452 = vadd.f32 %v412, %v451
        %v453 = vpop.f32.mrb[0].mxu0
        %v454 = vpop.f32.mrb[0].mxu0
        %v455 = vpop.f32.mrb[0].mxu0
        %456 = vdwg.mxu0
        %v457 = vpack.c.bf16 %v452, %v452
        %458 = vst.msk [vmem:[%s286] sm:$0xf] %vm364, %v457
        %v460 = vunpack.c.l.b16 %v457
        %v461 = vpack.c.b16 %v460, %v460
        %462 = vrot.lane.b32.xlu0 %v461, 120
        %v463 = vpop.permute.xlu0 %462
        %s465 = scalar_lea.vmem %s286, 4 [#allocation8]
        %466 = vst.msk [vmem:[%s465] sm:$0xf] %vm364, %v463
        %467 = vrot.lane.b32.xlu0 %v461, 112
        %v468 = vpop.permute.xlu0 %467
        %s470 = scalar_lea.vmem %s286, 8 [#allocation8]
        %471 = vst.msk [vmem:[%s470] sm:$0xf] %vm364, %v468
        %472 = vrot.lane.b32.xlu0 %v461, 104
        %v473 = vpop.permute.xlu0 %472
        %s475 = scalar_lea.vmem %s286, 12 [#allocation8]
        %476 = vst.msk [vmem:[%s475] sm:$0xf] %vm364, %v473
        %v477 = vld [vmem:[#allocation5] sm:$0xf]
        %v478 = vld [vmem:[#allocation5 + $0x4] sm:$0xf]
        %v479 = vld [vmem:[#allocation5 + $0x8] sm:$0xf]
        %v480 = vld [vmem:[#allocation5 + $0xc] sm:$0xf]
        %v481 = vld [vmem:[%s253] sm:$0xf]
        %v482 = vld [vmem:[%s2] sm:$0x1]
        %v484 = vlaneseq
        %v485 = vshrl.u32 %v484, 7
        %v486 = vsub.s32 0, %v485
        %v487 = vrot.slane %v482, %v486
        %v492 = vunpack.c.l.b16 %v477
        %v493 = vunpack.c.l.b16 %v478
        %v494 = vunpack.c.l.b16 %v479
        %v495 = vunpack.c.l.b16 %v480
        %v496 = vpack.c.b16 %v493, %v492
        %v497 = vpack.c.b16 %v495, %v494
        %498 = vrot.lane.b32.xlu0 %v496, 64
        %v499 = vpop.permute.xlu0 %498
        %500 = vrot.lane.b32.xlu0 %v497, 64
        %v501 = vpop.permute.xlu0 %500
        %504 = vrot.lane.b32.xlu0 %v487, 64
        %v505 = vpop.permute.xlu0 %504
        %v508 = vsel %vm319, %v481, 0
        %510 = vmatprep.subr.bf16.mxu0 0
        %511 = vmatpush1.bf16.msra.mxu0 %v499
        %512 = vmatprep.subr.bf16.mxu0 0
        %513 = vmatpush1.bf16.msra.mxu0 %v501
        %514 = vmatprep.subr.bf16.mxu0 0
        %515 = vmatpush1.bf16.msra.mxu0 0
        %516 = vmatprep.subr.bf16.mxu0 0
        %517 = vmatpush1.bf16.msra.mxu0 0
        %518 = vmatprep.subr.bf16.mxu0 0
        %519 = vmatpush1.bf16.msra.mxu0 0
        %520 = vmatprep.subr.bf16.mxu0 0
        %521 = vmatpush1.bf16.msra.mxu0 0
        %522 = vmatprep.subr.bf16.mxu0 0
        %523 = vmatpush1.bf16.msra.mxu0 0
        %524 = vmatprep.subr.bf16.mxu0 0
        %525 = vmatpush1.bf16.msra.mxu0 0
        %526 = vmatprep.subr.bf16.mxu0 0
        %527 = vmatpush1.bf16.msra.mxu0 0
        %528 = vmatprep.subr.bf16.mxu0 0
        %529 = vmatpush1.bf16.msra.mxu0 0
        %530 = vmatprep.subr.bf16.mxu0 0
        %531 = vmatpush1.bf16.msra.mxu0 0
        %532 = vmatprep.subr.bf16.mxu0 0
        %533 = vmatpush1.bf16.msra.mxu0 0
        %534 = vmatprep.subr.bf16.mxu0 0
        %535 = vmatpush1.bf16.msra.mxu0 0
        %536 = vmatprep.subr.bf16.mxu0 0
        %537 = vmatpush1.bf16.msra.mxu0 0
        %538 = vmatprep.subr.bf16.mxu0 0
        %539 = vmatpush1.bf16.msra.mxu0 0
        %540 = vmatprep.subr.bf16.mxu0 0
        %541 = vmatpush1.bf16.msra.mxu0 0
        %542 = vmatprep.mubr.bf16.mxu0 0
        %543 = vmatmul.mubr.bf16.gmra.mrb[0].mxu0 %v508
        %v544 = vpop.f32.mrb[0].mxu0
        %v545 = vadd.f32 %v505, %v544
        %v546 = vpop.f32.mrb[0].mxu0
        %v547 = vpop.f32.mrb[0].mxu0
        %v548 = vpop.f32.mrb[0].mxu0
        %549 = vdwg.mxu0
        %v550 = vpack.c.bf16 %v545, %v545
        %551 = vst.msk [vmem:[%s293] sm:$0xf] %vm364, %v550
        %v553 = vunpack.c.l.b16 %v550
        %v554 = vpack.c.b16 %v553, %v553
        %555 = vrot.lane.b32.xlu0 %v554, 120
        %v556 = vpop.permute.xlu0 %555
        %s558 = scalar_lea.vmem %s293, 4 [#allocation10]
        %559 = vst.msk [vmem:[%s558] sm:$0xf] %vm364, %v556
        %560 = vrot.lane.b32.xlu0 %v554, 112
        %v561 = vpop.permute.xlu0 %560
        %s563 = scalar_lea.vmem %s293, 8 [#allocation10]
        %564 = vst.msk [vmem:[%s563] sm:$0xf] %vm364, %v561
        %565 = vrot.lane.b32.xlu0 %v554, 104
        %v566 = vpop.permute.xlu0 %565
        %s568 = scalar_lea.vmem %s293, 12 [#allocation10]
        %569 = vst.msk [vmem:[%s568] sm:$0xf] %vm364, %v566
        %s570 = sand.u32 %s119, 1
        %s571 = scalar_lea.sflag [#allocation4], %s570
        %s572 = sand.u32 %s119, 1
        %s573 = smul.addr %s572, 16
        %s574 = scalar_lea.vmem [#allocation7], %s573
        %s575 = sand.u32 %s27, 1
        %s576 = scalar_lea.sflag [#allocation9], %s575
        %s577 = sand.u32 %s147, 1
        %s578 = smul.addr %s577, 16
        %s579 = scalar_lea.vmem [#allocation8], %s578
        %s580 = sand.u32 %s27, 1
        %s581 = scalar_lea.sflag [#allocation9], %s580
        %s582 = sand.u32 %s175, 1
        %s583 = smul.addr %s582, 16
        %s584 = scalar_lea.vmem [#allocation10], %s583
        // Predicated region
        $region41: #{tpu_custom_call.1} parent=31 // pred_check
          %p585 = pneg %p129
        $region42: #{tpu_custom_call.1} parent=31 // pred_check_branch
          %587 = sbr.rel (%p585) target = $region44
        $region43: #{tpu_custom_call.1} parent=31 // pred_region
          %s589 = ssub.s32 256, 256
          %590 = vsyncadd %s571, %s589
          %s591 = smul.addr %s31, 4
          %s592 = sadd.s32 %s32, %s591
          %s593 = smul.addr %s592, 64
          %s594 = scalar_lea.hbm %s3, %s593
          %s595 = sshll.u32 %s574, 4
          %s596 = int_to_ptr.vmem [resolvable:$true] %s595
          %601 = dma.vmem_to_hbm [thread:$0]  %s596, 256, %s594, %s571, 64, 64, 4
        $region44: #{tpu_custom_call.1} parent=31 // pred_fallthru
          _
        // Predicated region
        $region45: #{tpu_custom_call.1} parent=31 // pred_check
          %p602 = pneg %p157
        $region46: #{tpu_custom_call.1} parent=31 // pred_check_branch
          %604 = sbr.rel (%p602) target = $region48
        $region47: #{tpu_custom_call.1} parent=31 // pred_region
          %s606 = ssub.s32 256, 256
          %607 = vsyncadd %s576, %s606
          %s608 = smul.addr %s31, 4
          %s609 = sadd.s32 %s32, %s608
          %s610 = smul.addr %s609, 64
          %s611 = scalar_lea.hbm %s4, %s610
          %s612 = sshll.u32 %s579, 4
          %s613 = int_to_ptr.vmem [resolvable:$true] %s612
          %618 = dma.vmem_to_hbm [thread:$0]  %s613, 256, %s611, %s576, 64, 64, 4
        $region48: #{tpu_custom_call.1} parent=31 // pred_fallthru
          _
        // Predicated region
        $region49: #{tpu_custom_call.1} parent=31 // pred_check
          %p619 = pneg %p185
        $region50: #{tpu_custom_call.1} parent=31 // pred_check_branch
          %621 = sbr.rel (%p619) target = $region52
        $region51: #{tpu_custom_call.1} parent=31 // pred_region
          %s623 = ssub.s32 256, 256
          %624 = vsyncadd %s581, %s623
          %s625 = smul.addr %s31, 4
          %s626 = sadd.s32 %s32, %s625
          %s627 = smul.addr %s626, 64
          %s628 = scalar_lea.hbm %s5, %s627
          %s629 = sshll.u32 %s584, 4
          %s630 = int_to_ptr.vmem [resolvable:$true] %s629
          %635 = dma.vmem_to_hbm [thread:$0]  %s630, 256, %s628, %s581, 64, 64, 4
        $region52: #{tpu_custom_call.1} parent=31 // pred_fallthru
          _
      $region32: #{tpu_custom_call.1} parent=5 // pred_fallthru
        _
      %p636 = scmp.le.s32.totalorder 2, %s22
      // Predicated region
      $region53: #{tpu_custom_call.1} parent=5 // pred_check
        %p637 = pneg %p636
      $region54: #{tpu_custom_call.1} parent=5 // pred_check_branch
        %639 = sbr.rel (%p637) target = $region56
      $region55: #{tpu_custom_call.1} parent=5 // pred_region
        %s640 = ssub.s32 %s22, 2
        // Predicated region
        $region57: #{tpu_custom_call.1} parent=55 // pred_check
          %p641 = pneg %p135
        $region58: #{tpu_custom_call.1} parent=55 // pred_check_branch
          %643 = sbr.rel (%p641) target = $region60
        $region59: #{tpu_custom_call.1} parent=55 // pred_region
          %s644 = sand.u32 %s120, 1
          %s645 = scalar_lea.sflag [#allocation4], %s644
          %s646 = sand.u32 %s120, 1
          %s647 = smul.addr %s646, 16
          %s648 = scalar_lea.vmem [#allocation7], %s647
          %649 = dma.done %s645, 256
        $region60: #{tpu_custom_call.1} parent=55 // pred_fallthru
          _
        // Predicated region
        $region61: #{tpu_custom_call.1} parent=55 // pred_check
          %p650 = pneg %p163
        $region62: #{tpu_custom_call.1} parent=55 // pred_check_branch
          %652 = sbr.rel (%p650) target = $region64
        $region63: #{tpu_custom_call.1} parent=55 // pred_region
          %s653 = sand.u32 %s28, 1
          %s654 = scalar_lea.sflag [#allocation9], %s653
          %s655 = sand.u32 %s148, 1
          %s656 = smul.addr %s655, 16
          %s657 = scalar_lea.vmem [#allocation8], %s656
          %658 = dma.done %s654, 256
        $region64: #{tpu_custom_call.1} parent=55 // pred_fallthru
          _
        // Predicated region
        $region65: #{tpu_custom_call.1} parent=55 // pred_check
          %p659 = pneg %p191
        $region66: #{tpu_custom_call.1} parent=55 // pred_check_branch
          %661 = sbr.rel (%p659) target = $region68
        $region67: #{tpu_custom_call.1} parent=55 // pred_region
          %s662 = sand.u32 %s28, 1
          %s663 = scalar_lea.sflag [#allocation9], %s662
          %s664 = sand.u32 %s176, 1
          %s665 = smul.addr %s664, 16
          %s666 = scalar_lea.vmem [#allocation10], %s665
          %667 = dma.done %s663, 256
        $region68: #{tpu_custom_call.1} parent=55 // pred_fallthru
          _
      $region56: #{tpu_custom_call.1} parent=5 // pred_fallthru
        _
    $region6: #{tpu_custom_call.1} parent=1 // loop_footer
      %s26 = sadd.s32 1, %s22
    $region7: #{tpu_custom_call.1} parent=1 // loop_footer_branch
      %21 = sbr.rel target = $region3
    $region8: #{tpu_custom_call.1} parent=1 // loop_exit
      _
    %668 = vsyncpa [#allocation3], 1
    %s669 = scalar_lea.sflag [#allocation3], 1
    %670 = vsyncpa %s669, 1
    %671 = vsyncpa [#allocation6], 1
    %672 = vsyncpa [#allocation4], 1
    %s673 = scalar_lea.sflag [#allocation4], 1
    %674 = vsyncpa %s673, 1
    %675 = vsyncpa [#allocation9], 1
    %s676 = scalar_lea.sflag [#allocation9], 1
    %677 = vsyncpa %s676, 1

</llo_original>
